<compile_context>
chip_gen: v7x
topology: tpu7x:2x2x1
jax: 0.10.0
libtpu: 0.0.40
codegen_flags: <defaults>
</compile_context>

<pallas_src>
import functools

import jax
import jax.numpy as jnp
from jax.experimental import pallas as pl
from jax.experimental.pallas import tpu as pltpu


def reflection_kernel(qkin_ref, h_ref,
                      wf_ref, bf_ref, wv1h_ref, wv2_ref, bv2_ref,
                      sumblk_ref, mask_ref, rep_ref, expand_ref, collapse_ref,
                      out_ref, *, n_agents, n_actions, attn_dim, tile_rows, chunk_b):
    N, na, ad, TR = n_agents, n_actions, attn_dim, tile_rows
    TB = TR // N
    D = N * ad
    f32 = jnp.float32

    # one fused MXU pass over the streamed rows: [ query | keys | action-half of v1 ]
    # (scale folded into the query columns, bq/bk/bv1 folded into bf)
    fused = jnp.dot(qkin_ref[...], wf_ref[...], preferred_element_type=f32) + bf_ref[...]
    q_t = fused[:, 0:D]               # (TR, N*ad)  query tiled N-fold over lanes
    key_w = fused[:, D:2 * D]         # (TR, N*ad)  keys of all N agents
    av1 = fused[:, 2 * D:3 * D]       # (TR, N*ad)  action part of w_v layer 1 (+bv1)

    # attention scores: per-agent dot along attn_dim via constant block-sum matmul,
    # then tile-invariant additive self-mask (-1e9 on the query agent's own column).
    scores = jnp.dot(q_t * key_w, sumblk_ref[...], preferred_element_type=f32)
    scores = scores + mask_ref[...]                                   # (TR, N)

    mx = jnp.max(scores, axis=-1, keepdims=True)
    e = jnp.exp(scores - mx)
    attn = e / jnp.sum(e, axis=-1, keepdims=True)                     # (TR, N)

    # value path layer 1: h part computed once per batch row (TB rows) ...
    hv1 = jnp.dot(h_ref[...], wv1h_ref[...], preferred_element_type=f32)   # (TB, D)
    # ... expanded to the TR query rows with linear-cost chunked 0/1 matmuls.
    n_chunks = TB // chunk_b
    rep = rep_ref[...]                                                # (chunk_b*N, chunk_b)
    pieces = [jnp.dot(rep, hv1[c * chunk_b:(c + 1) * chunk_b, :],
                      preferred_element_type=f32) for c in range(n_chunks)]
    hv1_rep = pieces[0] if n_chunks == 1 else jnp.concatenate(pieces, axis=0)

    v1 = jnp.maximum(hv1_rep + av1, 0.0)                              # (TR, N*ad)
    value_w = jnp.dot(v1.astype(wv2_ref.dtype), wv2_ref[...],
                      preferred_element_type=f32) + bv2_ref[...]      # (TR, N*na)

    # attention-weighted sum over agents, as wide lane ops + small constant matmuls
    attn_e = jnp.dot(attn, expand_ref[...], preferred_element_type=f32)       # (TR, N*na)
    out = jnp.dot(value_w * attn_e, collapse_ref[...], preferred_element_type=f32)  # (TR, na)
    out_ref[...] = out.astype(out_ref.dtype)


def reflection_forward(o, o_next, h, actions, params, *, n_agents,
                       tile_rows=None, compute_dtype=jnp.float32):
    """actions: (R, N, n_actions) per-query-row key-agent actions; h: (R, rnn)."""
    R = o.shape[0]
    N = n_agents
    assert R % N == 0
    B = R // N
    rnn = h.shape[-1]
    n_actions = actions.shape[-1]
    attn_dim = params["wq"].shape[1]
    obs2 = o.shape[-1] + o_next.shape[-1]
    D = N * attn_dim
    f32 = jnp.float32

    unit = 8 * N
    if tile_rows is None:
        tile_rows = unit * max(1, 1024 // unit)       # ~1024 rows, multiple of 8*N
    assert tile_rows % unit == 0
    needed = unit * (-(-R // unit))
    tile_rows = min(tile_rows, needed)                # avoid over-padding tiny inputs
    TB = tile_rows // N
    chunk_b = 16 if TB % 16 == 0 else 8               # fixed chunk -> linear expansion cost

    # ---- fold scale / biases / block-diagonal structure into fused weights (once) ----
    scale = 1.0 / (attn_dim ** 0.5)
    bdiag = lambda w: jax.scipy.linalg.block_diag(*([w] * N))

    wq_t = jnp.tile(params["wq"], (1, N)) * scale                     # (2*obs, D)
    wk_b = bdiag(params["wk"])                                        # (N*na, D)
    wv1a_b = bdiag(params["wv1"][rnn:, :])                            # (N*na, D)
    Kq = obs2 + N * n_actions
    w_fused = jnp.zeros((Kq, 3 * D), f32)
    w_fused = w_fused.at[:obs2, 0:D].set(wq_t)
    w_fused = w_fused.at[obs2:, D:2 * D].set(wk_b)
    w_fused = w_fused.at[obs2:, 2 * D:3 * D].set(wv1a_b)
    b_fused = jnp.concatenate([jnp.tile(params["bq"], (1, N)) * scale,
                               jnp.tile(params["bk"], (1, N)),
                               jnp.tile(params["bv1"], (1, N))], axis=-1)   # (1, 3D)

    wv1h_b = bdiag(params["wv1"][:rnn, :])                            # (N*rnn, D)
    wv2_b = bdiag(params["wv2"])                                      # (D, N*na)
    bv2_t = jnp.tile(params["bv2"], (1, N))                           # (1, N*na)

    # ---- constant 0/1 matrices + self-mask, hoisted out of the kernel ----
    m = jnp.arange(D)
    sum_blk = (m[:, None] // attn_dim == jnp.arange(N)[None, :]).astype(f32)       # (D, N)
    p = jnp.arange(N * n_actions)
    expand = (jnp.arange(N)[:, None] == p[None, :] // n_actions).astype(f32)       # (N, N*na)
    collapse = (p[:, None] % n_actions ==
                jnp.arange(n_actions)[None, :]).astype(f32)                        # (N*na, na)
    rr = jnp.arange(chunk_b * N)
    rep = (rr[:, None] // N == jnp.arange(chunk_b)[None, :]).astype(f32)           # (chunk_b*N, chunk_b)
    rmod = jnp.arange(tile_rows) % N
    mask = jnp.where(jnp.arange(N)[None, :] == rmod[:, None], -1e9, 0.0).astype(f32)  # (TR, N)

    # ---- single fused streamed input; h deduped to one row per batch ----
    qkin = jnp.concatenate([o, o_next, actions.reshape(R, N * n_actions)], axis=-1)  # (R, Kq)
    h2d = h.reshape(B, N * rnn)                                                      # (B, N*rnn)

    R_pad = -(-R // tile_rows) * tile_rows
    B_pad = R_pad // N
    if R_pad != R:
        qkin = jnp.pad(qkin, ((0, R_pad - R), (0, 0)))
        h2d = jnp.pad(h2d, ((0, B_pad - B), (0, 0)))

    cd = compute_dtype
    qkin = qkin.astype(cd)
    h2d = h2d.astype(cd)
    w_fused = w_fused.astype(cd)
    wv1h_b = wv1h_b.astype(cd)
    wv2_b = wv2_b.astype(cd)
    # biases and constant 0/1 matrices stay f32 (used on f32 MXU accumulators)

    kernel = functools.partial(
        reflection_kernel, n_agents=N, n_actions=n_actions,
        attn_dim=attn_dim, tile_rows=tile_rows, chunk_b=chunk_b)

    row_spec = lambda w: pl.BlockSpec((tile_rows, w), lambda i: (i, 0))
    full_spec = lambda a: pl.BlockSpec(a.shape, lambda i: (0, 0))

    out = pl.pallas_call(
        kernel,
        out_shape=jax.ShapeDtypeStruct((R_pad, n_actions), jnp.float32),
        grid_spec=pltpu.PrefetchScalarGridSpec(
            num_scalar_prefetch=0,
            grid=(R_pad // tile_rows,),
            in_specs=[row_spec(Kq),
                      pl.BlockSpec((TB, N * rnn), lambda i: (i, 0)),
                      full_spec(w_fused), full_spec(b_fused), full_spec(wv1h_b),
                      full_spec(wv2_b), full_spec(bv2_t),
                      full_spec(sum_blk), full_spec(mask), full_spec(rep),
                      full_spec(expand), full_spec(collapse)],
            out_specs=row_spec(n_actions)),
        compiler_params=pltpu.CompilerParams(
            dimension_semantics=("parallel",),
            vmem_limit_bytes=32 * 1024 * 1024),
    )(qkin, h2d, w_fused, b_fused, wv1h_b, wv2_b, bv2_t,
      sum_blk, mask, rep, expand, collapse)
    return out[:R]


def reflection_reference(o, o_next, h, actions, p, *, n_agents):
    """Pure-JAX mirror of the PyTorch forward (test_mode=False) for checking."""
    R = o.shape[0]
    B = R // n_agents
    n_actions = actions.shape[-1]
    attn_dim = p["wq"].shape[1]

    query = (jnp.concatenate([o, o_next], -1) @ p["wq"] + p["bq"]) / (attn_dim ** 0.5)
    a_flat = actions.reshape(-1, n_actions)                                   # (R*N, na)
    key = (a_flat @ p["wk"] + p["bk"]).reshape(R, n_agents, attn_dim)

    h_rep = jnp.broadcast_to(h.reshape(B, 1, n_agents, -1),
                             (B, n_agents, n_agents, h.shape[-1])).reshape(R * n_agents, -1)
    inps = jnp.concatenate([h_rep, a_flat], -1)
    v1 = jnp.maximum(inps @ p["wv1"] + p["bv1"], 0.0)
    value = (v1 @ p["wv2"] + p["bv2"]).reshape(R, n_agents, n_actions)

    scores = jnp.einsum("rd,rjd->rj", query, key)                             # (R, N)
    rows = jnp.arange(R)[:, None] % n_agents
    cols = jnp.arange(n_agents)[None, :]
    scores = jnp.where(cols == rows, -1e9, scores)
    attn = jax.nn.softmax(scores, axis=-1)
    return jnp.sum(value * attn[..., None], axis=1)                           # (R, n_actions)


def _make_inputs(key, B, N, obs_shape, n_actions, rnn):
    R = B * N
    ks = jax.random.split(key, 4)
    o = jax.random.normal(ks[0], (R, obs_shape), jnp.float32)
    o_next = jax.random.normal(ks[1], (R, obs_shape), jnp.float32)
    h = jax.random.normal(ks[2], (R, rnn), jnp.float32)
    actions = jax.random.normal(ks[3], (R, N, n_actions), jnp.float32)
    return o, o_next, h, actions


if __name__ == "__main__":
    # args: obs_shape=16, attn_dim=32, n_actions=8, rnn_hidden_dim=32, n_agents=4
    N = 4
    obs_shape, attn_dim, n_actions, rnn = 16, 32, 8, 32

    key = jax.random.PRNGKey(0)
    kp, k1, k2 = jax.random.split(key, 3)
    ks = jax.random.split(kp, 8)
    params = {
        "wq":  0.1 * jax.random.normal(ks[0], (2 * obs_shape, attn_dim), jnp.float32),
        "bq":  0.1 * jax.random.normal(ks[1], (1, attn_dim), jnp.float32),
        "wk":  0.1 * jax.random.normal(ks[2], (n_actions, attn_dim), jnp.float32),
        "bk":  0.1 * jax.random.normal(ks[3], (1, attn_dim), jnp.float32),
        "wv1": 0.1 * jax.random.normal(ks[4], (rnn + n_actions, attn_dim), jnp.float32),
        "bv1": 0.1 * jax.random.normal(ks[5], (1, attn_dim), jnp.float32),
        "wv2": 0.1 * jax.random.normal(ks[6], (attn_dim, n_actions), jnp.float32),
        "bv2": 0.1 * jax.random.normal(ks[7], (1, n_actions), jnp.float32),
    }

    # ---- small test (B=4): single padded tile ----
    o, o_next, h, actions = _make_inputs(k1, 4, N, obs_shape, n_actions, rnn)
    ref = reflection_reference(o, o_next, h, actions, params, n_agents=N)

    out = reflection_forward(o, o_next, h, actions, params, n_agents=N)
    out = jax.block_until_ready(out)
    assert out.shape == ref.shape
    assert jnp.allclose(out, ref, atol=1e-3, rtol=1e-3), "f32 mismatch vs reference"

    out_bf = reflection_forward(o, o_next, h, actions, params, n_agents=N,
                                compute_dtype=jnp.bfloat16)
    out_bf = jax.block_until_ready(out_bf)
    assert jnp.allclose(out_bf, ref, atol=1e-1, rtol=1e-1), "bf16 mismatch vs reference"

    # ---- multi-tile test (B=37, tile_rows=128): grid>1, row padding, 2 rep-chunks ----
    o2, o2n, h2, a2 = _make_inputs(k2, 37, N, obs_shape, n_actions, rnn)
    ref2 = reflection_reference(o2, o2n, h2, a2, params, n_agents=N)
    out2 = reflection_forward(o2, o2n, h2, a2, params, n_agents=N, tile_rows=128)
    out2 = jax.block_until_ready(out2)
    assert out2.shape == ref2.shape
    assert jnp.allclose(out2, ref2, atol=1e-3, rtol=1e-3), "multi-tile mismatch vs reference"

    print("KERNEL_OK")
</pallas_src>

<mosaic_0001>
module attributes {stable_mosaic.version = 11 : i64} {
  func.func @reflection_kernel(%arg0: i32, %arg1: memref<32x64xf32, #tpu.memory_space<vmem>>, %arg2: memref<8x128xf32, #tpu.memory_space<vmem>>, %arg3: memref<64x384xf32, #tpu.memory_space<vmem>>, %arg4: memref<1x384xf32, #tpu.memory_space<vmem>>, %arg5: memref<128x128xf32, #tpu.memory_space<vmem>>, %arg6: memref<128x32xf32, #tpu.memory_space<vmem>>, %arg7: memref<1x32xf32, #tpu.memory_space<vmem>>, %arg8: memref<128x4xf32, #tpu.memory_space<vmem>>, %arg9: memref<32x4xf32, #tpu.memory_space<vmem>>, %arg10: memref<32x8xf32, #tpu.memory_space<vmem>>, %arg11: memref<4x32xf32, #tpu.memory_space<vmem>>, %arg12: memref<32x8xf32, #tpu.memory_space<vmem>>, %arg13: memref<32x8xf32, #tpu.memory_space<vmem>>) attributes {dimension_semantics = [#tpu.dimension_semantics<parallel>], iteration_bounds = array<i64: 1>, scalar_prefetch = 0 : i64, scratch_operands = 0 : i64, tpu.core_type = #tpu.core_type<tc>, window_params = [{transform_indices = @transform_0, window_bounds = array<i64: 32, 64>}, {transform_indices = @transform_1, window_bounds = array<i64: 8, 128>}, {pipeline_mode = #tpu.pipeline_mode<synchronous>, transform_indices = @transform_2, window_bounds = array<i64: 64, 384>}, {pipeline_mode = #tpu.pipeline_mode<synchronous>, transform_indices = @transform_3, window_bounds = array<i64: 1, 384>}, {pipeline_mode = #tpu.pipeline_mode<synchronous>, transform_indices = @transform_4, window_bounds = array<i64: 128, 128>}, {pipeline_mode = #tpu.pipeline_mode<synchronous>, transform_indices = @transform_5, window_bounds = array<i64: 128, 32>}, {pipeline_mode = #tpu.pipeline_mode<synchronous>, transform_indices = @transform_6, window_bounds = array<i64: 1, 32>}, {pipeline_mode = #tpu.pipeline_mode<synchronous>, transform_indices = @transform_7, window_bounds = array<i64: 128, 4>}, {pipeline_mode = #tpu.pipeline_mode<synchronous>, transform_indices = @transform_8, window_bounds = array<i64: 32, 4>}, {pipeline_mode = #tpu.pipeline_mode<synchronous>, transform_indices = @transform_9, window_bounds = array<i64: 32, 8>}, {pipeline_mode = #tpu.pipeline_mode<synchronous>, transform_indices = @transform_10, window_bounds = array<i64: 4, 32>}, {pipeline_mode = #tpu.pipeline_mode<synchronous>, transform_indices = @transform_11, window_bounds = array<i64: 32, 8>}, {transform_indices = @transform_12, window_bounds = array<i64: 32, 8>}]} {
    %c0 = arith.constant 0 : index
    %c0_0 = arith.constant 0 : index
    %0 = vector.load %arg1[%c0, %c0_0] : memref<32x64xf32, #tpu.memory_space<vmem>>, vector<32x64xf32>
    %c0_1 = arith.constant 0 : index
    %c0_2 = arith.constant 0 : index
    %1 = vector.load %arg3[%c0_1, %c0_2] : memref<64x384xf32, #tpu.memory_space<vmem>>, vector<64x384xf32>
    %cst = arith.constant dense<0.000000e+00> : vector<32x384xf32>
    %2 = tpu.matmul %0, %1, %cst {dimension_numbers = #tpu.dot_dimension_numbers<[1], [0], [0], [1], [0, 0, 1, 1], [], []>} : vector<32x64xf32>, vector<64x384xf32>, vector<32x384xf32> -> vector<32x384xf32>
    %c0_3 = arith.constant 0 : index
    %c0_4 = arith.constant 0 : index
    %3 = vector.load %arg4[%c0_3, %c0_4] : memref<1x384xf32, #tpu.memory_space<vmem>>, vector<1x384xf32>
    %4 = vector.broadcast %3 : vector<1x384xf32> to vector<32x384xf32>
    %5 = arith.addf %2, %4 : vector<32x384xf32>
    %6 = vector.extract_strided_slice %5 {offsets = [0, 0], sizes = [32, 128], strides = [1, 1]} : vector<32x384xf32> to vector<32x128xf32>
    %7 = vector.extract_strided_slice %5 {offsets = [0, 128], sizes = [32, 128], strides = [1, 1]} : vector<32x384xf32> to vector<32x128xf32>
    %8 = vector.extract_strided_slice %5 {offsets = [0, 256], sizes = [32, 128], strides = [1, 1]} : vector<32x384xf32> to vector<32x128xf32>
    %9 = arith.mulf %6, %7 : vector<32x128xf32>
    %c0_5 = arith.constant 0 : index
    %c0_6 = arith.constant 0 : index
    %10 = vector.load %arg8[%c0_5, %c0_6] : memref<128x4xf32, #tpu.memory_space<vmem>>, vector<128x4xf32>
    %cst_7 = arith.constant dense<0.000000e+00> : vector<32x4xf32>
    %11 = tpu.matmul %9, %10, %cst_7 {dimension_numbers = #tpu.dot_dimension_numbers<[1], [0], [0], [1], [0, 0, 1, 1], [], []>} : vector<32x128xf32>, vector<128x4xf32>, vector<32x4xf32> -> vector<32x4xf32>
    %c0_8 = arith.constant 0 : index
    %c0_9 = arith.constant 0 : index
    %12 = vector.load %arg9[%c0_8, %c0_9] : memref<32x4xf32, #tpu.memory_space<vmem>>, vector<32x4xf32>
    %13 = arith.addf %11, %12 : vector<32x4xf32>
    %cst_10 = arith.constant dense<0xFF800000> : vector<32xf32>
    %14 = vector.multi_reduction <maximumf>, %13, %cst_10 [1] : vector<32x4xf32> to vector<32xf32>
    %15 = vector.shape_cast %14 : vector<32xf32> to vector<32x1xf32>
    %16 = vector.broadcast %15 : vector<32x1xf32> to vector<32x4xf32>
    %17 = arith.subf %13, %16 : vector<32x4xf32>
    %18 = math.exp %17 : vector<32x4xf32>
    %cst_11 = arith.constant dense<0.000000e+00> : vector<32xf32>
    %19 = vector.multi_reduction <add>, %18, %cst_11 [1] : vector<32x4xf32> to vector<32xf32>
    %20 = vector.shape_cast %19 : vector<32xf32> to vector<32x1xf32>
    %21 = vector.broadcast %20 : vector<32x1xf32> to vector<32x4xf32>
    %22 = arith.divf %18, %21 : vector<32x4xf32>
    %c0_12 = arith.constant 0 : index
    %c0_13 = arith.constant 0 : index
    %23 = vector.load %arg2[%c0_12, %c0_13] : memref<8x128xf32, #tpu.memory_space<vmem>>, vector<8x128xf32>
    %c0_14 = arith.constant 0 : index
    %c0_15 = arith.constant 0 : index
    %24 = vector.load %arg5[%c0_14, %c0_15] : memref<128x128xf32, #tpu.memory_space<vmem>>, vector<128x128xf32>
    %cst_16 = arith.constant dense<0.000000e+00> : vector<8x128xf32>
    %25 = tpu.matmul %23, %24, %cst_16 {dimension_numbers = #tpu.dot_dimension_numbers<[1], [0], [0], [1], [0, 0, 1, 1], [], []>} : vector<8x128xf32>, vector<128x128xf32>, vector<8x128xf32> -> vector<8x128xf32>
    %c0_17 = arith.constant 0 : index
    %c0_18 = arith.constant 0 : index
    %26 = vector.load %arg10[%c0_17, %c0_18] : memref<32x8xf32, #tpu.memory_space<vmem>>, vector<32x8xf32>
    %cst_19 = arith.constant dense<0.000000e+00> : vector<32x128xf32>
    %27 = tpu.matmul %26, %25, %cst_19 {dimension_numbers = #tpu.dot_dimension_numbers<[1], [0], [0], [1], [0, 0, 1, 1], [], []>} : vector<32x8xf32>, vector<8x128xf32>, vector<32x128xf32> -> vector<32x128xf32>
    %28 = arith.addf %27, %8 : vector<32x128xf32>
    %cst_20 = arith.constant 0.000000e+00 : f32
    %29 = vector.broadcast %cst_20 : f32 to vector<32x128xf32>
    %30 = arith.maximumf %28, %29 : vector<32x128xf32>
    %c0_21 = arith.constant 0 : index
    %c0_22 = arith.constant 0 : index
    %31 = vector.load %arg6[%c0_21, %c0_22] : memref<128x32xf32, #tpu.memory_space<vmem>>, vector<128x32xf32>
    %cst_23 = arith.constant dense<0.000000e+00> : vector<32x32xf32>
    %32 = tpu.matmul %30, %31, %cst_23 {dimension_numbers = #tpu.dot_dimension_numbers<[1], [0], [0], [1], [0, 0, 1, 1], [], []>} : vector<32x128xf32>, vector<128x32xf32>, vector<32x32xf32> -> vector<32x32xf32>
    %c0_24 = arith.constant 0 : index
    %c0_25 = arith.constant 0 : index
    %33 = vector.load %arg7[%c0_24, %c0_25] : memref<1x32xf32, #tpu.memory_space<vmem>>, vector<1x32xf32>
    %34 = vector.broadcast %33 : vector<1x32xf32> to vector<32x32xf32>
    %35 = arith.addf %32, %34 : vector<32x32xf32>
    %c0_26 = arith.constant 0 : index
    %c0_27 = arith.constant 0 : index
    %36 = vector.load %arg11[%c0_26, %c0_27] : memref<4x32xf32, #tpu.memory_space<vmem>>, vector<4x32xf32>
    %cst_28 = arith.constant dense<0.000000e+00> : vector<32x32xf32>
    %37 = tpu.matmul %22, %36, %cst_28 {dimension_numbers = #tpu.dot_dimension_numbers<[1], [0], [0], [1], [0, 0, 1, 1], [], []>} : vector<32x4xf32>, vector<4x32xf32>, vector<32x32xf32> -> vector<32x32xf32>
    %38 = arith.mulf %35, %37 : vector<32x32xf32>
    %c0_29 = arith.constant 0 : index
    %c0_30 = arith.constant 0 : index
    %39 = vector.load %arg12[%c0_29, %c0_30] : memref<32x8xf32, #tpu.memory_space<vmem>>, vector<32x8xf32>
    %cst_31 = arith.constant dense<0.000000e+00> : vector<32x8xf32>
    %40 = tpu.matmul %38, %39, %cst_31 {dimension_numbers = #tpu.dot_dimension_numbers<[1], [0], [0], [1], [0, 0, 1, 1], [], []>} : vector<32x32xf32>, vector<32x8xf32>, vector<32x8xf32> -> vector<32x8xf32>
    %c0_32 = arith.constant 0 : index
    %c0_33 = arith.constant 0 : index
    %41 = vector.load %arg13[%c0_32, %c0_33] : memref<32x8xf32, #tpu.memory_space<vmem>>, vector<32x8xf32>
    tpu.vector_store %arg13[%c0_32, %c0_33], %40 {strides = array<i32>} : memref<32x8xf32, #tpu.memory_space<vmem>>, vector<32x8xf32>,
    return
  }
  func.func @transform_0(%arg0: i32) -> (i32, i32) {
    %c0_i32 = arith.constant 0 : i32
    %c0_i32_0 = arith.constant 0 : i32
    return %arg0, %c0_i32 : i32, i32
  }
  func.func @transform_1(%arg0: i32) -> (i32, i32) {
    %c0_i32 = arith.constant 0 : i32
    %c0_i32_0 = arith.constant 0 : i32
    return %arg0, %c0_i32 : i32, i32
  }
  func.func @transform_2(%arg0: i32) -> (i32, i32) {
    %c0_i32 = arith.constant 0 : i32
    %c0_i32_0 = arith.constant 0 : i32
    %c0_i32_1 = arith.constant 0 : i32
    return %c0_i32, %c0_i32_0 : i32, i32
  }
  func.func @transform_3(%arg0: i32) -> (i32, i32) {
    %c0_i32 = arith.constant 0 : i32
    %c0_i32_0 = arith.constant 0 : i32
    %c0_i32_1 = arith.constant 0 : i32
    return %c0_i32, %c0_i32_0 : i32, i32
  }
  func.func @transform_4(%arg0: i32) -> (i32, i32) {
    %c0_i32 = arith.constant 0 : i32
    %c0_i32_0 = arith.constant 0 : i32
    %c0_i32_1 = arith.constant 0 : i32
    return %c0_i32, %c0_i32_0 : i32, i32
  }
  func.func @transform_5(%arg0: i32) -> (i32, i32) {
    %c0_i32 = arith.constant 0 : i32
    %c0_i32_0 = arith.constant 0 : i32
    %c0_i32_1 = arith.constant 0 : i32
    return %c0_i32, %c0_i32_0 : i32, i32
  }
  func.func @transform_6(%arg0: i32) -> (i32, i32) {
    %c0_i32 = arith.constant 0 : i32
    %c0_i32_0 = arith.constant 0 : i32
    %c0_i32_1 = arith.constant 0 : i32
    return %c0_i32, %c0_i32_0 : i32, i32
  }
  func.func @transform_7(%arg0: i32) -> (i32, i32) {
    %c0_i32 = arith.constant 0 : i32
    %c0_i32_0 = arith.constant 0 : i32
    %c0_i32_1 = arith.constant 0 : i32
    return %c0_i32, %c0_i32_0 : i32, i32
  }
  func.func @transform_8(%arg0: i32) -> (i32, i32) {
    %c0_i32 = arith.constant 0 : i32
    %c0_i32_0 = arith.constant 0 : i32
    %c0_i32_1 = arith.constant 0 : i32
    return %c0_i32, %c0_i32_0 : i32, i32
  }
  func.func @transform_9(%arg0: i32) -> (i32, i32) {
    %c0_i32 = arith.constant 0 : i32
    %c0_i32_0 = arith.constant 0 : i32
    %c0_i32_1 = arith.constant 0 : i32
    return %c0_i32, %c0_i32_0 : i32, i32
  }
  func.func @transform_10(%arg0: i32) -> (i32, i32) {
    %c0_i32 = arith.constant 0 : i32
    %c0_i32_0 = arith.constant 0 : i32
    %c0_i32_1 = arith.constant 0 : i32
    return %c0_i32, %c0_i32_0 : i32, i32
  }
  func.func @transform_11(%arg0: i32) -> (i32, i32) {
    %c0_i32 = arith.constant 0 : i32
    %c0_i32_0 = arith.constant 0 : i32
    %c0_i32_1 = arith.constant 0 : i32
    return %c0_i32, %c0_i32_0 : i32, i32
  }
  func.func @transform_12(%arg0: i32) -> (i32, i32) {
    %c0_i32 = arith.constant 0 : i32
    %c0_i32_0 = arith.constant 0 : i32
    return %arg0, %c0_i32 : i32, i32
  }
}

</mosaic_0001>

<llo_original>
// kernel: tpu_custom_call.1
$region0: #{tpu_custom_call.1}
  #allocation0 [shape = 'u32[]', space=smem, size = 0x4, offset = 0x4, fixed_abs, tag = 'smem constant byte address 0x4 - core index']
  #allocation1 [shape = 'u32[144,128]{1,0:T(1,128)}', space=vmem, size = 0x12000, scoped, tag = 'internal scratch']
  %s0 = inlined_call_operand.vmem [shape: f32[32,64], index: 0, kind: input, shape index: {}]
  %s1 = inlined_call_operand.vmem [shape: f32[8,128], index: 1, kind: input, shape index: {}]
  %s2 = inlined_call_operand.vmem [shape: f32[64,384], index: 2, kind: input, shape index: {}]
  %s3 = inlined_call_operand.vmem [shape: f32[1,384], index: 3, kind: input, shape index: {}]
  %s4 = inlined_call_operand.vmem [shape: f32[128,128], index: 4, kind: input, shape index: {}]
  %s5 = inlined_call_operand.vmem [shape: f32[128,32], index: 5, kind: input, shape index: {}]
  %s6 = inlined_call_operand.vmem [shape: f32[1,32], index: 6, kind: input, shape index: {}]
  %s7 = inlined_call_operand.vmem [shape: f32[128,4], index: 7, kind: input, shape index: {}]
  %s8 = inlined_call_operand.vmem [shape: f32[32,4], index: 8, kind: input, shape index: {}]
  %s9 = inlined_call_operand.vmem [shape: f32[32,8], index: 9, kind: input, shape index: {}]
  %s10 = inlined_call_operand.vmem [shape: f32[4,32], index: 10, kind: input, shape index: {}]
  %s11 = inlined_call_operand.vmem [shape: f32[32,8], index: 11, kind: input, shape index: {}]
  %s12 = inlined_call_operand.vmem [shape: f32[32,8], index: 12, kind: output, shape index: {}]
  %s13 = sld [smem:[#allocation0]]
  $region58: #{tpu_custom_call.1} parent=0
    _
  %s15 = ssub.s32 1, %s13
  %s16 = scalar_select 0, %s15, %s13
  // Predicated region
  $region2: #{tpu_custom_call.1} parent=0 // pred_check
    _
  $region3: #{tpu_custom_call.1} parent=0 // pred_check_branch
    %18 = sbr.rel (0) target = $region5
  $region4: #{tpu_custom_call.1} parent=0 // pred_region
    _
  $region5: #{tpu_custom_call.1} parent=0 // pred_fallthru
    _
  // Predicated region
  $region6: #{tpu_custom_call.1} parent=0 // pred_check
    _
  $region7: #{tpu_custom_call.1} parent=0 // pred_check_branch
    %20 = sbr.rel (0) target = $region9
  $region8: #{tpu_custom_call.1} parent=0 // pred_region
    _
  $region9: #{tpu_custom_call.1} parent=0 // pred_fallthru
    _
  // Predicated region
  $region10: #{tpu_custom_call.1} parent=0 // pred_check
    _
  $region11: #{tpu_custom_call.1} parent=0 // pred_check_branch
    %22 = sbr.rel (0) target = $region13
  $region12: #{tpu_custom_call.1} parent=0 // pred_region
    _
  $region13: #{tpu_custom_call.1} parent=0 // pred_fallthru
    _
  // Predicated region
  $region14: #{tpu_custom_call.1} parent=0 // pred_check
    _
  $region15: #{tpu_custom_call.1} parent=0 // pred_check_branch
    %24 = sbr.rel (0) target = $region17
  $region16: #{tpu_custom_call.1} parent=0 // pred_region
    _
  $region17: #{tpu_custom_call.1} parent=0 // pred_fallthru
    _
  // Predicated region
  $region18: #{tpu_custom_call.1} parent=0 // pred_check
    _
  $region19: #{tpu_custom_call.1} parent=0 // pred_check_branch
    %26 = sbr.rel (0) target = $region21
  $region20: #{tpu_custom_call.1} parent=0 // pred_region
    _
  $region21: #{tpu_custom_call.1} parent=0 // pred_fallthru
    _
  // Predicated region
  $region22: #{tpu_custom_call.1} parent=0 // pred_check
    _
  $region23: #{tpu_custom_call.1} parent=0 // pred_check_branch
    %28 = sbr.rel (0) target = $region25
  $region24: #{tpu_custom_call.1} parent=0 // pred_region
    _
  $region25: #{tpu_custom_call.1} parent=0 // pred_fallthru
    _
  // Predicated region
  $region26: #{tpu_custom_call.1} parent=0 // pred_check
    _
  $region27: #{tpu_custom_call.1} parent=0 // pred_check_branch
    %30 = sbr.rel (0) target = $region29
  $region28: #{tpu_custom_call.1} parent=0 // pred_region
    _
  $region29: #{tpu_custom_call.1} parent=0 // pred_fallthru
    _
  // Predicated region
  $region30: #{tpu_custom_call.1} parent=0 // pred_check
    _
  $region31: #{tpu_custom_call.1} parent=0 // pred_check_branch
    %32 = sbr.rel (0) target = $region33
  $region32: #{tpu_custom_call.1} parent=0 // pred_region
    _
  $region33: #{tpu_custom_call.1} parent=0 // pred_fallthru
    _
  // Predicated region
  $region34: #{tpu_custom_call.1} parent=0 // pred_check
    _
  $region35: #{tpu_custom_call.1} parent=0 // pred_check_branch
    %34 = sbr.rel (0) target = $region37
  $region36: #{tpu_custom_call.1} parent=0 // pred_region
    _
  $region37: #{tpu_custom_call.1} parent=0 // pred_fallthru
    _
  // Predicated region
  $region38: #{tpu_custom_call.1} parent=0 // pred_check
    _
  $region39: #{tpu_custom_call.1} parent=0 // pred_check_branch
    %36 = sbr.rel (0) target = $region41
  $region40: #{tpu_custom_call.1} parent=0 // pred_region
    _
  $region41: #{tpu_custom_call.1} parent=0 // pred_fallthru
    _
  // Predicated region
  $region42: #{tpu_custom_call.1} parent=0 // pred_check
    _
  $region43: #{tpu_custom_call.1} parent=0 // pred_check_branch
    %38 = sbr.rel (0) target = $region45
  $region44: #{tpu_custom_call.1} parent=0 // pred_region
    _
  $region45: #{tpu_custom_call.1} parent=0 // pred_fallthru
    _
  // Predicated region
  $region46: #{tpu_custom_call.1} parent=0 // pred_check
    _
  $region47: #{tpu_custom_call.1} parent=0 // pred_check_branch
    %40 = sbr.rel (0) target = $region49
  $region48: #{tpu_custom_call.1} parent=0 // pred_region
    _
  $region49: #{tpu_custom_call.1} parent=0 // pred_fallthru
    _
  %v41 = vld [vmem:[%s0] sm:$0xff]
  %v42 = vld [vmem:[%s0 + $0x8] sm:$0xff]
  %v43 = vld [vmem:[%s0 + $0x10] sm:$0xff]
  %v44 = vld [vmem:[%s0 + $0x18] sm:$0xff]
  %v45 = vld [vmem:[%s2] sm:$0xff]
  %v46 = vld [vmem:[%s2 + $0x8] sm:$0xff]
  %v47 = vld [vmem:[%s2 + $0x10] sm:$0xff]
  %v48 = vld [vmem:[%s2 + $0x18] sm:$0xff]
  %v49 = vld [vmem:[%s2 + $0x20] sm:$0xff]
  %v50 = vld [vmem:[%s2 + $0x28] sm:$0xff]
  %v51 = vld [vmem:[%s2 + $0x30] sm:$0xff]
  %v52 = vld [vmem:[%s2 + $0x38] sm:$0xff]
  %v53 = vld [vmem:[%s2 + $0x40] sm:$0xff]
  %v54 = vld [vmem:[%s2 + $0x48] sm:$0xff]
  %v55 = vld [vmem:[%s2 + $0x50] sm:$0xff]
  %v56 = vld [vmem:[%s2 + $0x58] sm:$0xff]
  %v57 = vld [vmem:[%s2 + $0x60] sm:$0xff]
  %v58 = vld [vmem:[%s2 + $0x68] sm:$0xff]
  %v59 = vld [vmem:[%s2 + $0x70] sm:$0xff]
  %v60 = vld [vmem:[%s2 + $0x78] sm:$0xff]
  %v61 = vld [vmem:[%s2 + $0x80] sm:$0xff]
  %v62 = vld [vmem:[%s2 + $0x88] sm:$0xff]
  %v63 = vld [vmem:[%s2 + $0x90] sm:$0xff]
  %v64 = vld [vmem:[%s2 + $0x98] sm:$0xff]
  %v65 = vld [vmem:[%s2 + $0xa0] sm:$0xff]
  %v66 = vld [vmem:[%s2 + $0xa8] sm:$0xff]
  %v67 = vld [vmem:[%s2 + $0xb0] sm:$0xff]
  %v68 = vld [vmem:[%s2 + $0xb8] sm:$0xff]
  %v69 = vld [vmem:[%s3] sm:$0x7]
  %v71 = vlaneseq
  %v72 = vshrl.u32 %v71, 7
  %v73 = vsub.s32 0, %v72
  %v74 = vrot.slane %v69, %v73
  %v75 = vlaneseq
  %v76 = vshrl.u32 %v75, 7
  %v77 = vsub.s32 1, %v76
  %v78 = vrot.slane %v69, %v77
  %v79 = vlaneseq
  %v80 = vshrl.u32 %v79, 7
  %v81 = vsub.s32 2, %v80
  %v82 = vrot.slane %v69, %v81
  %vm86 = vcmask 523264
  %v88 = vsel %vm86, %v41, 0
  %v91 = vsel %vm86, %v42, 0
  %v94 = vsel %vm86, %v43, 0
  %v97 = vsel %vm86, %v44, 0
  %99 = vmatprep.subr.mxu0 %v46
  %100 = vmatpush1.msra.mxu0 %v45
  %101 = vmatprep.subr.mxu0 %v49
  %102 = vmatpush1.msra.mxu0 %v48
  %103 = vmatprep.subr.mxu0 %v52
  %104 = vmatpush1.msra.mxu0 %v51
  %105 = vmatprep.subr.mxu0 %v55
  %106 = vmatpush1.msra.mxu0 %v54
  %107 = vmatprep.subr.mxu0 %v58
  %108 = vmatpush1.msra.mxu0 %v57
  %109 = vmatprep.subr.mxu0 %v61
  %110 = vmatpush1.msra.mxu0 %v60
  %111 = vmatprep.subr.mxu0 %v64
  %112 = vmatpush1.msra.mxu0 %v63
  %113 = vmatprep.subr.mxu0 %v67
  %114 = vmatpush1.msra.mxu0 %v66
  %115 = vmatprep.subr.mxu0 0.0
  %116 = vmatpush1.msra.mxu0 0.0
  %117 = vmatprep.subr.mxu0 0.0
  %118 = vmatpush1.msra.mxu0 0.0
  %119 = vmatprep.subr.mxu0 0.0
  %120 = vmatpush1.msra.mxu0 0.0
  %121 = vmatprep.subr.mxu0 0.0
  %122 = vmatpush1.msra.mxu0 0.0
  %123 = vmatprep.subr.mxu0 0.0
  %124 = vmatpush1.msra.mxu0 0.0
  %125 = vmatprep.subr.mxu0 0.0
  %126 = vmatpush1.msra.mxu0 0.0
  %127 = vmatprep.subr.mxu0 0.0
  %128 = vmatpush1.msra.mxu0 0.0
  %129 = vmatprep.subr.mxu0 0.0
  %130 = vmatpush1.msra.mxu0 0.0
  %131 = vmatprep.subr.mxu0 0.0
  %132 = vmatpush1.msra.mxu0 0.0
  %133 = vmatprep.subr.mxu0 0.0
  %134 = vmatpush1.msra.mxu0 0.0
  %135 = vmatprep.subr.mxu0 0.0
  %136 = vmatpush1.msra.mxu0 0.0
  %137 = vmatprep.subr.mxu0 0.0
  %138 = vmatpush1.msra.mxu0 0.0
  %139 = vmatprep.subr.mxu0 0.0
  %140 = vmatpush1.msra.mxu0 0.0
  %141 = vmatprep.subr.mxu0 0.0
  %142 = vmatpush1.msra.mxu0 0.0
  %143 = vmatprep.subr.mxu0 0.0
  %144 = vmatpush1.msra.mxu0 0.0
  %145 = vmatprep.subr.mxu0 0.0
  %146 = vmatpush1.msra.mxu0 0.0
  %147 = vmatprep.subr.mxu0 0.0
  %148 = vmatpush1.msra.mxu0 0.0
  %149 = vmatprep.subr.mxu0 0.0
  %150 = vmatpush1.msra.mxu0 0.0
  %151 = vmatprep.subr.mxu0 0.0
  %152 = vmatpush1.msra.mxu0 0.0
  %153 = vmatprep.subr.mxu0 0.0
  %154 = vmatpush1.msra.mxu0 0.0
  %155 = vmatprep.subr.mxu0 0.0
  %156 = vmatpush1.msra.mxu0 0.0
  %157 = vmatprep.subr.mxu0 0.0
  %158 = vmatpush1.msra.mxu0 0.0
  %159 = vmatprep.subr.mxu0 0.0
  %160 = vmatpush1.msra.mxu0 0.0
  %161 = vmatprep.subr.mxu0 0.0
  %162 = vmatpush1.msra.mxu0 0.0
  %163 = vmatprep.mubr.f32.mxu0 0.0
  %164 = vmatmul.mubr.f32.gmra.mrb[0].mxu0 %v88
  %v165 = vpop.f32.mrb[0].mxu0
  %v166 = vadd.f32 %v74, %v165
  %v167 = vpop.f32.mrb[0].mxu0
  %v168 = vadd.f32 %v78, %v167
  %169 = vmatprep.mubr.f32.mxu0 0.0
  %170 = vmatmul.mubr.f32.gmra.mrb[0].mxu0 %v91
  %v171 = vpop.f32.mrb[0].mxu0
  %v172 = vadd.f32 %v74, %v171
  %v173 = vpop.f32.mrb[0].mxu0
  %v174 = vadd.f32 %v78, %v173
  %175 = vmatprep.mubr.f32.mxu0 0.0
  %176 = vmatmul.mubr.f32.gmra.mrb[0].mxu0 %v94
  %v177 = vpop.f32.mrb[0].mxu0
  %v178 = vadd.f32 %v74, %v177
  %v179 = vpop.f32.mrb[0].mxu0
  %v180 = vadd.f32 %v78, %v179
  %181 = vmatprep.mubr.f32.mxu0 0.0
  %182 = vmatmul.mubr.f32.gmra.mrb[0].mxu0 %v97
  %v183 = vpop.f32.mrb[0].mxu0
  %v184 = vadd.f32 %v74, %v183
  %v185 = vpop.f32.mrb[0].mxu0
  %v186 = vadd.f32 %v78, %v185
  %187 = vdwg.mxu0
  %188 = vmatprep.subr.mxu0 0.0
  %189 = vmatpush1.msra.mxu0 %v47
  %190 = vmatprep.subr.mxu0 0.0
  %191 = vmatpush1.msra.mxu0 %v50
  %192 = vmatprep.subr.mxu0 0.0
  %193 = vmatpush1.msra.mxu0 %v53
  %194 = vmatprep.subr.mxu0 0.0
  %195 = vmatpush1.msra.mxu0 %v56
  %196 = vmatprep.subr.mxu0 0.0
  %197 = vmatpush1.msra.mxu0 %v59
  %198 = vmatprep.subr.mxu0 0.0
  %199 = vmatpush1.msra.mxu0 %v62
  %200 = vmatprep.subr.mxu0 0.0
  %201 = vmatpush1.msra.mxu0 %v65
  %202 = vmatprep.subr.mxu0 0.0
  %203 = vmatpush1.msra.mxu0 %v68
  %204 = vmatprep.subr.mxu0 0.0
  %205 = vmatpush1.msra.mxu0 0.0
  %206 = vmatprep.subr.mxu0 0.0
  %207 = vmatpush1.msra.mxu0 0.0
  %208 = vmatprep.subr.mxu0 0.0
  %209 = vmatpush1.msra.mxu0 0.0
  %210 = vmatprep.subr.mxu0 0.0
  %211 = vmatpush1.msra.mxu0 0.0
  %212 = vmatprep.subr.mxu0 0.0
  %213 = vmatpush1.msra.mxu0 0.0
  %214 = vmatprep.subr.mxu0 0.0
  %215 = vmatpush1.msra.mxu0 0.0
  %216 = vmatprep.subr.mxu0 0.0
  %217 = vmatpush1.msra.mxu0 0.0
  %218 = vmatprep.subr.mxu0 0.0
  %219 = vmatpush1.msra.mxu0 0.0
  %220 = vmatprep.subr.mxu0 0.0
  %221 = vmatpush1.msra.mxu0 0.0
  %222 = vmatprep.subr.mxu0 0.0
  %223 = vmatpush1.msra.mxu0 0.0
  %224 = vmatprep.subr.mxu0 0.0
  %225 = vmatpush1.msra.mxu0 0.0
  %226 = vmatprep.subr.mxu0 0.0
  %227 = vmatpush1.msra.mxu0 0.0
  %228 = vmatprep.subr.mxu0 0.0
  %229 = vmatpush1.msra.mxu0 0.0
  %230 = vmatprep.subr.mxu0 0.0
  %231 = vmatpush1.msra.mxu0 0.0
  %232 = vmatprep.subr.mxu0 0.0
  %233 = vmatpush1.msra.mxu0 0.0
  %234 = vmatprep.subr.mxu0 0.0
  %235 = vmatpush1.msra.mxu0 0.0
  %236 = vmatprep.subr.mxu0 0.0
  %237 = vmatpush1.msra.mxu0 0.0
  %238 = vmatprep.subr.mxu0 0.0
  %239 = vmatpush1.msra.mxu0 0.0
  %240 = vmatprep.subr.mxu0 0.0
  %241 = vmatpush1.msra.mxu0 0.0
  %242 = vmatprep.subr.mxu0 0.0
  %243 = vmatpush1.msra.mxu0 0.0
  %244 = vmatprep.subr.mxu0 0.0
  %245 = vmatpush1.msra.mxu0 0.0
  %246 = vmatprep.subr.mxu0 0.0
  %247 = vmatpush1.msra.mxu0 0.0
  %248 = vmatprep.subr.mxu0 0.0
  %249 = vmatpush1.msra.mxu0 0.0
  %250 = vmatprep.subr.mxu0 0.0
  %251 = vmatpush1.msra.mxu0 0.0
  %252 = vmatprep.mubr.f32.mxu0 0.0
  %253 = vmatmul.mubr.f32.gmra.mrb[0].mxu0 %v88
  %v254 = vpop.f32.mrb[0].mxu0
  %v255 = vadd.f32 %v82, %v254
  %v256 = vpop.f32.mrb[0].mxu0
  %257 = vmatprep.mubr.f32.mxu0 0.0
  %258 = vmatmul.mubr.f32.gmra.mrb[0].mxu0 %v91
  %v259 = vpop.f32.mrb[0].mxu0
  %v260 = vadd.f32 %v82, %v259
  %v261 = vpop.f32.mrb[0].mxu0
  %262 = vmatprep.mubr.f32.mxu0 0.0
  %263 = vmatmul.mubr.f32.gmra.mrb[0].mxu0 %v94
  %v264 = vpop.f32.mrb[0].mxu0
  %v265 = vadd.f32 %v82, %v264
  %v266 = vpop.f32.mrb[0].mxu0
  %267 = vmatprep.mubr.f32.mxu0 0.0
  %268 = vmatmul.mubr.f32.gmra.mrb[0].mxu0 %v97
  %v269 = vpop.f32.mrb[0].mxu0
  %v270 = vadd.f32 %v82, %v269
  %v271 = vpop.f32.mrb[0].mxu0
  %272 = vdwg.mxu0
  %v273 = vmul.f32 %v166, %v168
  %v274 = vmul.f32 %v172, %v174
  %v275 = vmul.f32 %v178, %v180
  %v276 = vmul.f32 %v184, %v186
  %v277 = vld [vmem:[%s7] sm:$0xff]
  %v278 = vld [vmem:[%s7 + $0x8] sm:$0xff]
  %v279 = vld [vmem:[%s7 + $0x10] sm:$0xff]
  %v280 = vld [vmem:[%s7 + $0x18] sm:$0xff]
  %v281 = vld [vmem:[%s7 + $0x20] sm:$0xff]
  %v282 = vld [vmem:[%s7 + $0x28] sm:$0xff]
  %v283 = vld [vmem:[%s7 + $0x30] sm:$0xff]
  %v284 = vld [vmem:[%s7 + $0x38] sm:$0xff]
  %v285 = vld [vmem:[%s7 + $0x40] sm:$0xff]
  %v286 = vld [vmem:[%s7 + $0x48] sm:$0xff]
  %v287 = vld [vmem:[%s7 + $0x50] sm:$0xff]
  %v288 = vld [vmem:[%s7 + $0x58] sm:$0xff]
  %v289 = vld [vmem:[%s7 + $0x60] sm:$0xff]
  %v290 = vld [vmem:[%s7 + $0x68] sm:$0xff]
  %v291 = vld [vmem:[%s7 + $0x70] sm:$0xff]
  %v292 = vld [vmem:[%s7 + $0x78] sm:$0xff]
  %v293 = vld [vmem:[%s8] sm:$0xff]
  %v294 = vld [vmem:[%s8 + $0x8] sm:$0xff]
  %v295 = vld [vmem:[%s8 + $0x10] sm:$0xff]
  %v296 = vld [vmem:[%s8 + $0x18] sm:$0xff]
  %297 = vmatprep.subr.mxu0 0.0
  %298 = vmatpush1.msra.mxu0 %v277
  %299 = vmatprep.subr.mxu0 0.0
  %300 = vmatpush1.msra.mxu0 %v278
  %301 = vmatprep.subr.mxu0 0.0
  %302 = vmatpush1.msra.mxu0 %v279
  %303 = vmatprep.subr.mxu0 0.0
  %304 = vmatpush1.msra.mxu0 %v280
  %305 = vmatprep.subr.mxu0 0.0
  %306 = vmatpush1.msra.mxu0 %v281
  %307 = vmatprep.subr.mxu0 0.0
  %308 = vmatpush1.msra.mxu0 %v282
  %309 = vmatprep.subr.mxu0 0.0
  %310 = vmatpush1.msra.mxu0 %v283
  %311 = vmatprep.subr.mxu0 0.0
  %312 = vmatpush1.msra.mxu0 %v284
  %313 = vmatprep.subr.mxu0 0.0
  %314 = vmatpush1.msra.mxu0 %v285
  %315 = vmatprep.subr.mxu0 0.0
  %316 = vmatpush1.msra.mxu0 %v286
  %317 = vmatprep.subr.mxu0 0.0
  %318 = vmatpush1.msra.mxu0 %v287
  %319 = vmatprep.subr.mxu0 0.0
  %320 = vmatpush1.msra.mxu0 %v288
  %321 = vmatprep.subr.mxu0 0.0
  %322 = vmatpush1.msra.mxu0 %v289
  %323 = vmatprep.subr.mxu0 0.0
  %324 = vmatpush1.msra.mxu0 %v290
  %325 = vmatprep.subr.mxu0 0.0
  %326 = vmatpush1.msra.mxu0 %v291
  %327 = vmatprep.subr.mxu0 0.0
  %328 = vmatpush1.msra.mxu0 %v292
  %329 = vmatprep.subr.mxu0 0.0
  %330 = vmatpush1.msra.mxu0 0.0
  %331 = vmatprep.subr.mxu0 0.0
  %332 = vmatpush1.msra.mxu0 0.0
  %333 = vmatprep.subr.mxu0 0.0
  %334 = vmatpush1.msra.mxu0 0.0
  %335 = vmatprep.subr.mxu0 0.0
  %336 = vmatpush1.msra.mxu0 0.0
  %337 = vmatprep.subr.mxu0 0.0
  %338 = vmatpush1.msra.mxu0 0.0
  %339 = vmatprep.subr.mxu0 0.0
  %340 = vmatpush1.msra.mxu0 0.0
  %341 = vmatprep.subr.mxu0 0.0
  %342 = vmatpush1.msra.mxu0 0.0
  %343 = vmatprep.subr.mxu0 0.0
  %344 = vmatpush1.msra.mxu0 0.0
  %345 = vmatprep.subr.mxu0 0.0
  %346 = vmatpush1.msra.mxu0 0.0
  %347 = vmatprep.subr.mxu0 0.0
  %348 = vmatpush1.msra.mxu0 0.0
  %349 = vmatprep.subr.mxu0 0.0
  %350 = vmatpush1.msra.mxu0 0.0
  %351 = vmatprep.subr.mxu0 0.0
  %352 = vmatpush1.msra.mxu0 0.0
  %353 = vmatprep.subr.mxu0 0.0
  %354 = vmatpush1.msra.mxu0 0.0
  %355 = vmatprep.subr.mxu0 0.0
  %356 = vmatpush1.msra.mxu0 0.0
  %357 = vmatprep.subr.mxu0 0.0
  %358 = vmatpush1.msra.mxu0 0.0
  %359 = vmatprep.subr.mxu0 0.0
  %360 = vmatpush1.msra.mxu0 0.0
  %361 = vmatprep.mubr.f32.mxu0 0.0
  %362 = vmatmul.mubr.f32.gmra.mrb[0].mxu0 %v273
  %v363 = vpop.f32.mrb[0].mxu0
  %v364 = vadd.f32 %v293, %v363
  %v365 = vpop.f32.mrb[0].mxu0
  %366 = vmatprep.mubr.f32.mxu0 0.0
  %367 = vmatmul.mubr.f32.gmra.mrb[0].mxu0 %v274
  %v368 = vpop.f32.mrb[0].mxu0
  %v369 = vadd.f32 %v294, %v368
  %v370 = vpop.f32.mrb[0].mxu0
  %371 = vmatprep.mubr.f32.mxu0 0.0
  %372 = vmatmul.mubr.f32.gmra.mrb[0].mxu0 %v275
  %v373 = vpop.f32.mrb[0].mxu0
  %v374 = vadd.f32 %v295, %v373
  %v375 = vpop.f32.mrb[0].mxu0
  %376 = vmatprep.mubr.f32.mxu0 0.0
  %377 = vmatmul.mubr.f32.gmra.mrb[0].mxu0 %v276
  %v378 = vpop.f32.mrb[0].mxu0
  %v379 = vadd.f32 %v296, %v378
  %v380 = vpop.f32.mrb[0].mxu0
  %381 = vdwg.mxu0
  %vm382 = vcmask 31744
  %v383 = vsel %vm382, %v364, -inf
  %384 = vmax.xlane.f32.xlu0 %v383
  %v385 = vpop.xlane.xlu0 %384
  %v386 = vsel %vm382, %v369, -inf
  %387 = vmax.xlane.f32.xlu0 %v386
  %v388 = vpop.xlane.xlu0 %387
  %v389 = vsel %vm382, %v374, -inf
  %390 = vmax.xlane.f32.xlu0 %v389
  %v391 = vpop.xlane.xlu0 %390
  %v392 = vsel %vm382, %v379, -inf
  %393 = vmax.xlane.f32.xlu0 %v392
  %v394 = vpop.xlane.xlu0 %393
  %v395 = vsub.f32 %v364, %v385
  %v396 = vsub.f32 %v369, %v388
  %v397 = vsub.f32 %v374, %v391
  %v398 = vsub.f32 %v379, %v394
  %v399 = vmul.f32 %v395, 1.442695
  %v400 = vpow.pop %v399
  %v401 = vmul.f32 %v396, 1.442695
  %v402 = vpow.pop %v401
  %v403 = vmul.f32 %v397, 1.442695
  %v404 = vpow.pop %v403
  %v405 = vmul.f32 %v398, 1.442695
  %v406 = vpow.pop %v405
  %v407 = vsel %vm382, %v400, 0.0
  %408 = vadd.xlane.f32.xlu0 %v407
  %v409 = vpop.xlane.xlu0 %408
  %v410 = vsel %vm382, %v402, 0.0
  %411 = vadd.xlane.f32.xlu0 %v410
  %v412 = vpop.xlane.xlu0 %411
  %v413 = vsel %vm382, %v404, 0.0
  %414 = vadd.xlane.f32.xlu0 %v413
  %v415 = vpop.xlane.xlu0 %414
  %v416 = vsel %vm382, %v406, 0.0
  %417 = vadd.xlane.f32.xlu0 %v416
  %v418 = vpop.xlane.xlu0 %417
  %v419 = vrcp.pop %v409
  %v420 = vmul.f32 %v400, %v419
  %v421 = vrcp.pop %v412
  %v422 = vmul.f32 %v402, %v421
  %v423 = vrcp.pop %v415
  %v424 = vmul.f32 %v404, %v423
  %v425 = vrcp.pop %v418
  %v426 = vmul.f32 %v406, %v425
  %v427 = vld [vmem:[%s1] sm:$0xff]
  %v428 = vld [vmem:[%s4] sm:$0xff]
  %v429 = vld [vmem:[%s4 + $0x8] sm:$0xff]
  %v430 = vld [vmem:[%s4 + $0x10] sm:$0xff]
  %v431 = vld [vmem:[%s4 + $0x18] sm:$0xff]
  %v432 = vld [vmem:[%s4 + $0x20] sm:$0xff]
  %v433 = vld [vmem:[%s4 + $0x28] sm:$0xff]
  %v434 = vld [vmem:[%s4 + $0x30] sm:$0xff]
  %v435 = vld [vmem:[%s4 + $0x38] sm:$0xff]
  %v436 = vld [vmem:[%s4 + $0x40] sm:$0xff]
  %v437 = vld [vmem:[%s4 + $0x48] sm:$0xff]
  %v438 = vld [vmem:[%s4 + $0x50] sm:$0xff]
  %v439 = vld [vmem:[%s4 + $0x58] sm:$0xff]
  %v440 = vld [vmem:[%s4 + $0x60] sm:$0xff]
  %v441 = vld [vmem:[%s4 + $0x68] sm:$0xff]
  %v442 = vld [vmem:[%s4 + $0x70] sm:$0xff]
  %v443 = vld [vmem:[%s4 + $0x78] sm:$0xff]
  %444 = vmatprep.subr.mxu0 0.0
  %445 = vmatpush1.msra.mxu0 %v428
  %446 = vmatprep.subr.mxu0 0.0
  %447 = vmatpush1.msra.mxu0 %v429
  %448 = vmatprep.subr.mxu0 0.0
  %449 = vmatpush1.msra.mxu0 %v430
  %450 = vmatprep.subr.mxu0 0.0
  %451 = vmatpush1.msra.mxu0 %v431
  %452 = vmatprep.subr.mxu0 0.0
  %453 = vmatpush1.msra.mxu0 %v432
  %454 = vmatprep.subr.mxu0 0.0
  %455 = vmatpush1.msra.mxu0 %v433
  %456 = vmatprep.subr.mxu0 0.0
  %457 = vmatpush1.msra.mxu0 %v434
  %458 = vmatprep.subr.mxu0 0.0
  %459 = vmatpush1.msra.mxu0 %v435
  %460 = vmatprep.subr.mxu0 0.0
  %461 = vmatpush1.msra.mxu0 %v436
  %462 = vmatprep.subr.mxu0 0.0
  %463 = vmatpush1.msra.mxu0 %v437
  %464 = vmatprep.subr.mxu0 0.0
  %465 = vmatpush1.msra.mxu0 %v438
  %466 = vmatprep.subr.mxu0 0.0
  %467 = vmatpush1.msra.mxu0 %v439
  %468 = vmatprep.subr.mxu0 0.0
  %469 = vmatpush1.msra.mxu0 %v440
  %470 = vmatprep.subr.mxu0 0.0
  %471 = vmatpush1.msra.mxu0 %v441
  %472 = vmatprep.subr.mxu0 0.0
  %473 = vmatpush1.msra.mxu0 %v442
  %474 = vmatprep.subr.mxu0 0.0
  %475 = vmatpush1.msra.mxu0 %v443
  %476 = vmatprep.subr.mxu0 0.0
  %477 = vmatpush1.msra.mxu0 0.0
  %478 = vmatprep.subr.mxu0 0.0
  %479 = vmatpush1.msra.mxu0 0.0
  %480 = vmatprep.subr.mxu0 0.0
  %481 = vmatpush1.msra.mxu0 0.0
  %482 = vmatprep.subr.mxu0 0.0
  %483 = vmatpush1.msra.mxu0 0.0
  %484 = vmatprep.subr.mxu0 0.0
  %485 = vmatpush1.msra.mxu0 0.0
  %486 = vmatprep.subr.mxu0 0.0
  %487 = vmatpush1.msra.mxu0 0.0
  %488 = vmatprep.subr.mxu0 0.0
  %489 = vmatpush1.msra.mxu0 0.0
  %490 = vmatprep.subr.mxu0 0.0
  %491 = vmatpush1.msra.mxu0 0.0
  %492 = vmatprep.subr.mxu0 0.0
  %493 = vmatpush1.msra.mxu0 0.0
  %494 = vmatprep.subr.mxu0 0.0
  %495 = vmatpush1.msra.mxu0 0.0
  %496 = vmatprep.subr.mxu0 0.0
  %497 = vmatpush1.msra.mxu0 0.0
  %498 = vmatprep.subr.mxu0 0.0
  %499 = vmatpush1.msra.mxu0 0.0
  %500 = vmatprep.subr.mxu0 0.0
  %501 = vmatpush1.msra.mxu0 0.0
  %502 = vmatprep.subr.mxu0 0.0
  %503 = vmatpush1.msra.mxu0 0.0
  %504 = vmatprep.subr.mxu0 0.0
  %505 = vmatpush1.msra.mxu0 0.0
  %506 = vmatprep.subr.mxu0 0.0
  %507 = vmatpush1.msra.mxu0 0.0
  %508 = vmatprep.mubr.f32.mxu0 0.0
  %509 = vmatmul.mubr.f32.gmra.mrb[0].mxu0 %v427
  %v510 = vpop.f32.mrb[0].mxu0
  %v511 = vadd.f32 0.0, %v510
  %v512 = vpop.f32.mrb[0].mxu0
  %513 = vdwg.mxu0
  %v514 = vld [vmem:[%s9] sm:$0xff]
  %v515 = vld [vmem:[%s9 + $0x8] sm:$0xff]
  %v516 = vld [vmem:[%s9 + $0x10] sm:$0xff]
  %v517 = vld [vmem:[%s9 + $0x18] sm:$0xff]
  %vm518 = vcmask 64512
  %v520 = vsel %vm518, %v514, 0
  %v523 = vsel %vm518, %v515, 0
  %v526 = vsel %vm518, %v516, 0
  %v529 = vsel %vm518, %v517, 0
  %531 = vmatprep.subr.mxu0 0.0
  %532 = vmatpush1.msra.mxu0 %v511
  %533 = vmatprep.subr.mxu0 0.0
  %534 = vmatpush1.msra.mxu0 0.0
  %535 = vmatprep.subr.mxu0 0.0
  %536 = vmatpush1.msra.mxu0 0.0
  %537 = vmatprep.subr.mxu0 0.0
  %538 = vmatpush1.msra.mxu0 0.0
  %539 = vmatprep.subr.mxu0 0.0
  %540 = vmatpush1.msra.mxu0 0.0
  %541 = vmatprep.subr.mxu0 0.0
  %542 = vmatpush1.msra.mxu0 0.0
  %543 = vmatprep.subr.mxu0 0.0
  %544 = vmatpush1.msra.mxu0 0.0
  %545 = vmatprep.subr.mxu0 0.0
  %546 = vmatpush1.msra.mxu0 0.0
  %547 = vmatprep.subr.mxu0 0.0
  %548 = vmatpush1.msra.mxu0 0.0
  %549 = vmatprep.subr.mxu0 0.0
  %550 = vmatpush1.msra.mxu0 0.0
  %551 = vmatprep.subr.mxu0 0.0
  %552 = vmatpush1.msra.mxu0 0.0
  %553 = vmatprep.subr.mxu0 0.0
  %554 = vmatpush1.msra.mxu0 0.0
  %555 = vmatprep.subr.mxu0 0.0
  %556 = vmatpush1.msra.mxu0 0.0
  %557 = vmatprep.subr.mxu0 0.0
  %558 = vmatpush1.msra.mxu0 0.0
  %559 = vmatprep.subr.mxu0 0.0
  %560 = vmatpush1.msra.mxu0 0.0
  %561 = vmatprep.subr.mxu0 0.0
  %562 = vmatpush1.msra.mxu0 0.0
  %563 = vmatprep.subr.mxu0 0.0
  %564 = vmatpush1.msra.mxu0 0.0
  %565 = vmatprep.subr.mxu0 0.0
  %566 = vmatpush1.msra.mxu0 0.0
  %567 = vmatprep.subr.mxu0 0.0
  %568 = vmatpush1.msra.mxu0 0.0
  %569 = vmatprep.subr.mxu0 0.0
  %570 = vmatpush1.msra.mxu0 0.0
  %571 = vmatprep.subr.mxu0 0.0
  %572 = vmatpush1.msra.mxu0 0.0
  %573 = vmatprep.subr.mxu0 0.0
  %574 = vmatpush1.msra.mxu0 0.0
  %575 = vmatprep.subr.mxu0 0.0
  %576 = vmatpush1.msra.mxu0 0.0
  %577 = vmatprep.subr.mxu0 0.0
  %578 = vmatpush1.msra.mxu0 0.0
  %579 = vmatprep.subr.mxu0 0.0
  %580 = vmatpush1.msra.mxu0 0.0
  %581 = vmatprep.subr.mxu0 0.0
  %582 = vmatpush1.msra.mxu0 0.0
  %583 = vmatprep.subr.mxu0 0.0
  %584 = vmatpush1.msra.mxu0 0.0
  %585 = vmatprep.subr.mxu0 0.0
  %586 = vmatpush1.msra.mxu0 0.0
  %587 = vmatprep.subr.mxu0 0.0
  %588 = vmatpush1.msra.mxu0 0.0
  %589 = vmatprep.subr.mxu0 0.0
  %590 = vmatpush1.msra.mxu0 0.0
  %591 = vmatprep.subr.mxu0 0.0
  %592 = vmatpush1.msra.mxu0 0.0
  %593 = vmatprep.subr.mxu0 0.0
  %594 = vmatpush1.msra.mxu0 0.0
  %595 = vmatprep.mubr.f32.mxu0 0.0
  %596 = vmatmul.mubr.f32.gmra.mrb[0].mxu0 %v520
  %v597 = vpop.f32.mrb[0].mxu0
  %v598 = vadd.f32 %v255, %v597
  %v599 = vpop.f32.mrb[0].mxu0
  %600 = vmatprep.mubr.f32.mxu0 0.0
  %601 = vmatmul.mubr.f32.gmra.mrb[0].mxu0 %v523
  %v602 = vpop.f32.mrb[0].mxu0
  %v603 = vadd.f32 %v260, %v602
  %v604 = vpop.f32.mrb[0].mxu0
  %605 = vmatprep.mubr.f32.mxu0 0.0
  %606 = vmatmul.mubr.f32.gmra.mrb[0].mxu0 %v526
  %v607 = vpop.f32.mrb[0].mxu0
  %v608 = vadd.f32 %v265, %v607
  %v609 = vpop.f32.mrb[0].mxu0
  %610 = vmatprep.mubr.f32.mxu0 0.0
  %611 = vmatmul.mubr.f32.gmra.mrb[0].mxu0 %v529
  %v612 = vpop.f32.mrb[0].mxu0
  %v613 = vadd.f32 %v270, %v612
  %v614 = vpop.f32.mrb[0].mxu0
  %615 = vdwg.mxu0
  %v616 = vmax.f32 %v598, 0.0
  %v617 = vmax.f32 %v603, 0.0
  %v618 = vmax.f32 %v608, 0.0
  %v619 = vmax.f32 %v613, 0.0
  %v620 = vld [vmem:[%s5] sm:$0xff]
  %v621 = vld [vmem:[%s5 + $0x8] sm:$0xff]
  %v622 = vld [vmem:[%s5 + $0x10] sm:$0xff]
  %v623 = vld [vmem:[%s5 + $0x18] sm:$0xff]
  %v624 = vld [vmem:[%s5 + $0x20] sm:$0xff]
  %v625 = vld [vmem:[%s5 + $0x28] sm:$0xff]
  %v626 = vld [vmem:[%s5 + $0x30] sm:$0xff]
  %v627 = vld [vmem:[%s5 + $0x38] sm:$0xff]
  %v628 = vld [vmem:[%s5 + $0x40] sm:$0xff]
  %v629 = vld [vmem:[%s5 + $0x48] sm:$0xff]
  %v630 = vld [vmem:[%s5 + $0x50] sm:$0xff]
  %v631 = vld [vmem:[%s5 + $0x58] sm:$0xff]
  %v632 = vld [vmem:[%s5 + $0x60] sm:$0xff]
  %v633 = vld [vmem:[%s5 + $0x68] sm:$0xff]
  %v634 = vld [vmem:[%s5 + $0x70] sm:$0xff]
  %v635 = vld [vmem:[%s5 + $0x78] sm:$0xff]
  %v636 = vld [vmem:[%s6] sm:$0x1]
  %v638 = vlaneseq
  %v639 = vshrl.u32 %v638, 7
  %v640 = vsub.s32 0, %v639
  %v641 = vrot.slane %v636, %v640
  %643 = vmatprep.subr.mxu0 0.0
  %644 = vmatpush1.msra.mxu0 %v620
  %645 = vmatprep.subr.mxu0 0.0
  %646 = vmatpush1.msra.mxu0 %v621
  %647 = vmatprep.subr.mxu0 0.0
  %648 = vmatpush1.msra.mxu0 %v622
  %649 = vmatprep.subr.mxu0 0.0
  %650 = vmatpush1.msra.mxu0 %v623
  %651 = vmatprep.subr.mxu0 0.0
  %652 = vmatpush1.msra.mxu0 %v624
  %653 = vmatprep.subr.mxu0 0.0
  %654 = vmatpush1.msra.mxu0 %v625
  %655 = vmatprep.subr.mxu0 0.0
  %656 = vmatpush1.msra.mxu0 %v626
  %657 = vmatprep.subr.mxu0 0.0
  %658 = vmatpush1.msra.mxu0 %v627
  %659 = vmatprep.subr.mxu0 0.0
  %660 = vmatpush1.msra.mxu0 %v628
  %661 = vmatprep.subr.mxu0 0.0
  %662 = vmatpush1.msra.mxu0 %v629
  %663 = vmatprep.subr.mxu0 0.0
  %664 = vmatpush1.msra.mxu0 %v630
  %665 = vmatprep.subr.mxu0 0.0
  %666 = vmatpush1.msra.mxu0 %v631
  %667 = vmatprep.subr.mxu0 0.0
  %668 = vmatpush1.msra.mxu0 %v632
  %669 = vmatprep.subr.mxu0 0.0
  %670 = vmatpush1.msra.mxu0 %v633
  %671 = vmatprep.subr.mxu0 0.0
  %672 = vmatpush1.msra.mxu0 %v634
  %673 = vmatprep.subr.mxu0 0.0
  %674 = vmatpush1.msra.mxu0 %v635
  %675 = vmatprep.subr.mxu0 0.0
  %676 = vmatpush1.msra.mxu0 0.0
  %677 = vmatprep.subr.mxu0 0.0
  %678 = vmatpush1.msra.mxu0 0.0
  %679 = vmatprep.subr.mxu0 0.0
  %680 = vmatpush1.msra.mxu0 0.0
  %681 = vmatprep.subr.mxu0 0.0
  %682 = vmatpush1.msra.mxu0 0.0
  %683 = vmatprep.subr.mxu0 0.0
  %684 = vmatpush1.msra.mxu0 0.0
  %685 = vmatprep.subr.mxu0 0.0
  %686 = vmatpush1.msra.mxu0 0.0
  %687 = vmatprep.subr.mxu0 0.0
  %688 = vmatpush1.msra.mxu0 0.0
  %689 = vmatprep.subr.mxu0 0.0
  %690 = vmatpush1.msra.mxu0 0.0
  %691 = vmatprep.subr.mxu0 0.0
  %692 = vmatpush1.msra.mxu0 0.0
  %693 = vmatprep.subr.mxu0 0.0
  %694 = vmatpush1.msra.mxu0 0.0
  %695 = vmatprep.subr.mxu0 0.0
  %696 = vmatpush1.msra.mxu0 0.0
  %697 = vmatprep.subr.mxu0 0.0
  %698 = vmatpush1.msra.mxu0 0.0
  %699 = vmatprep.subr.mxu0 0.0
  %700 = vmatpush1.msra.mxu0 0.0
  %701 = vmatprep.subr.mxu0 0.0
  %702 = vmatpush1.msra.mxu0 0.0
  %703 = vmatprep.subr.mxu0 0.0
  %704 = vmatpush1.msra.mxu0 0.0
  %705 = vmatprep.subr.mxu0 0.0
  %706 = vmatpush1.msra.mxu0 0.0
  %707 = vmatprep.mubr.f32.mxu0 0.0
  %708 = vmatmul.mubr.f32.gmra.mrb[0].mxu0 %v616
  %v709 = vpop.f32.mrb[0].mxu0
  %v710 = vadd.f32 %v641, %v709
  %v711 = vpop.f32.mrb[0].mxu0
  %712 = vmatprep.mubr.f32.mxu0 0.0
  %713 = vmatmul.mubr.f32.gmra.mrb[0].mxu0 %v617
  %v714 = vpop.f32.mrb[0].mxu0
  %v715 = vadd.f32 %v641, %v714
  %v716 = vpop.f32.mrb[0].mxu0
  %717 = vmatprep.mubr.f32.mxu0 0.0
  %718 = vmatmul.mubr.f32.gmra.mrb[0].mxu0 %v618
  %v719 = vpop.f32.mrb[0].mxu0
  %v720 = vadd.f32 %v641, %v719
  %v721 = vpop.f32.mrb[0].mxu0
  %722 = vmatprep.mubr.f32.mxu0 0.0
  %723 = vmatmul.mubr.f32.gmra.mrb[0].mxu0 %v619
  %v724 = vpop.f32.mrb[0].mxu0
  %v725 = vadd.f32 %v641, %v724
  %v726 = vpop.f32.mrb[0].mxu0
  %727 = vdwg.mxu0
  %v728 = vld [vmem:[%s10] sm:$0xf]
  %v730 = vsel %vm382, %v420, 0
  %v733 = vsel %vm382, %v422, 0
  %v736 = vsel %vm382, %v424, 0
  %v739 = vsel %vm382, %v426, 0
  %vm741 = vcmask 1043456
  %v743 = vsel %vm741, %v728, 0
  %745 = vmatprep.subr.mxu0 0.0
  %746 = vmatpush1.msra.mxu0 %v743
  %747 = vmatprep.subr.mxu0 0.0
  %748 = vmatpush1.msra.mxu0 0.0
  %749 = vmatprep.subr.mxu0 0.0
  %750 = vmatpush1.msra.mxu0 0.0
  %751 = vmatprep.subr.mxu0 0.0
  %752 = vmatpush1.msra.mxu0 0.0
  %753 = vmatprep.subr.mxu0 0.0
  %754 = vmatpush1.msra.mxu0 0.0
  %755 = vmatprep.subr.mxu0 0.0
  %756 = vmatpush1.msra.mxu0 0.0
  %757 = vmatprep.subr.mxu0 0.0
  %758 = vmatpush1.msra.mxu0 0.0
  %759 = vmatprep.subr.mxu0 0.0
  %760 = vmatpush1.msra.mxu0 0.0
  %761 = vmatprep.subr.mxu0 0.0
  %762 = vmatpush1.msra.mxu0 0.0
  %763 = vmatprep.subr.mxu0 0.0
  %764 = vmatpush1.msra.mxu0 0.0
  %765 = vmatprep.subr.mxu0 0.0
  %766 = vmatpush1.msra.mxu0 0.0
  %767 = vmatprep.subr.mxu0 0.0
  %768 = vmatpush1.msra.mxu0 0.0
  %769 = vmatprep.subr.mxu0 0.0
  %770 = vmatpush1.msra.mxu0 0.0
  %771 = vmatprep.subr.mxu0 0.0
  %772 = vmatpush1.msra.mxu0 0.0
  %773 = vmatprep.subr.mxu0 0.0
  %774 = vmatpush1.msra.mxu0 0.0
  %775 = vmatprep.subr.mxu0 0.0
  %776 = vmatpush1.msra.mxu0 0.0
  %777 = vmatprep.subr.mxu0 0.0
  %778 = vmatpush1.msra.mxu0 0.0
  %779 = vmatprep.subr.mxu0 0.0
  %780 = vmatpush1.msra.mxu0 0.0
  %781 = vmatprep.subr.mxu0 0.0
  %782 = vmatpush1.msra.mxu0 0.0
  %783 = vmatprep.subr.mxu0 0.0
  %784 = vmatpush1.msra.mxu0 0.0
  %785 = vmatprep.subr.mxu0 0.0
  %786 = vmatpush1.msra.mxu0 0.0
  %787 = vmatprep.subr.mxu0 0.0
  %788 = vmatpush1.msra.mxu0 0.0
  %789 = vmatprep.subr.mxu0 0.0
  %790 = vmatpush1.msra.mxu0 0.0
  %791 = vmatprep.subr.mxu0 0.0
  %792 = vmatpush1.msra.mxu0 0.0
  %793 = vmatprep.subr.mxu0 0.0
  %794 = vmatpush1.msra.mxu0 0.0
  %795 = vmatprep.subr.mxu0 0.0
  %796 = vmatpush1.msra.mxu0 0.0
  %797 = vmatprep.subr.mxu0 0.0
  %798 = vmatpush1.msra.mxu0 0.0
  %799 = vmatprep.subr.mxu0 0.0
  %800 = vmatpush1.msra.mxu0 0.0
  %801 = vmatprep.subr.mxu0 0.0
  %802 = vmatpush1.msra.mxu0 0.0
  %803 = vmatprep.subr.mxu0 0.0
  %804 = vmatpush1.msra.mxu0 0.0
  %805 = vmatprep.subr.mxu0 0.0
  %806 = vmatpush1.msra.mxu0 0.0
  %807 = vmatprep.subr.mxu0 0.0
  %808 = vmatpush1.msra.mxu0 0.0
  %809 = vmatprep.mubr.f32.mxu0 0.0
  %810 = vmatmul.mubr.f32.gmra.mrb[0].mxu0 %v730
  %v811 = vpop.f32.mrb[0].mxu0
  %v812 = vadd.f32 0.0, %v811
  %v813 = vpop.f32.mrb[0].mxu0
  %814 = vmatprep.mubr.f32.mxu0 0.0
  %815 = vmatmul.mubr.f32.gmra.mrb[0].mxu0 %v733
  %v816 = vpop.f32.mrb[0].mxu0
  %v817 = vadd.f32 0.0, %v816
  %v818 = vpop.f32.mrb[0].mxu0
  %819 = vmatprep.mubr.f32.mxu0 0.0
  %820 = vmatmul.mubr.f32.gmra.mrb[0].mxu0 %v736
  %v821 = vpop.f32.mrb[0].mxu0
  %v822 = vadd.f32 0.0, %v821
  %v823 = vpop.f32.mrb[0].mxu0
  %824 = vmatprep.mubr.f32.mxu0 0.0
  %825 = vmatmul.mubr.f32.gmra.mrb[0].mxu0 %v739
  %v826 = vpop.f32.mrb[0].mxu0
  %v827 = vadd.f32 0.0, %v826
  %v828 = vpop.f32.mrb[0].mxu0
  %829 = vdwg.mxu0
  %v830 = vmul.f32 %v710, %v812
  %v831 = vmul.f32 %v715, %v817
  %v832 = vmul.f32 %v720, %v822
  %v833 = vmul.f32 %v725, %v827
  %v834 = vld [vmem:[%s11] sm:$0xff]
  %v835 = vld [vmem:[%s11 + $0x8] sm:$0xff]
  %v836 = vld [vmem:[%s11 + $0x10] sm:$0xff]
  %v837 = vld [vmem:[%s11 + $0x18] sm:$0xff]
  %vm838 = vcmask 261120
  %v840 = vsel %vm838, %v830, 0
  %v843 = vsel %vm838, %v831, 0
  %v846 = vsel %vm838, %v832, 0
  %v849 = vsel %vm838, %v833, 0
  %851 = vmatprep.subr.mxu0 0.0
  %852 = vmatpush1.msra.mxu0 %v834
  %853 = vmatprep.subr.mxu0 0.0
  %854 = vmatpush1.msra.mxu0 %v835
  %855 = vmatprep.subr.mxu0 0.0
  %856 = vmatpush1.msra.mxu0 %v836
  %857 = vmatprep.subr.mxu0 0.0
  %858 = vmatpush1.msra.mxu0 %v837
  %859 = vmatprep.subr.mxu0 0.0
  %860 = vmatpush1.msra.mxu0 0.0
  %861 = vmatprep.subr.mxu0 0.0
  %862 = vmatpush1.msra.mxu0 0.0
  %863 = vmatprep.subr.mxu0 0.0
  %864 = vmatpush1.msra.mxu0 0.0
  %865 = vmatprep.subr.mxu0 0.0
  %866 = vmatpush1.msra.mxu0 0.0
  %867 = vmatprep.subr.mxu0 0.0
  %868 = vmatpush1.msra.mxu0 0.0
  %869 = vmatprep.subr.mxu0 0.0
  %870 = vmatpush1.msra.mxu0 0.0
  %871 = vmatprep.subr.mxu0 0.0
  %872 = vmatpush1.msra.mxu0 0.0
  %873 = vmatprep.subr.mxu0 0.0
  %874 = vmatpush1.msra.mxu0 0.0
  %875 = vmatprep.subr.mxu0 0.0
  %876 = vmatpush1.msra.mxu0 0.0
  %877 = vmatprep.subr.mxu0 0.0
  %878 = vmatpush1.msra.mxu0 0.0
  %879 = vmatprep.subr.mxu0 0.0
  %880 = vmatpush1.msra.mxu0 0.0
  %881 = vmatprep.subr.mxu0 0.0
  %882 = vmatpush1.msra.mxu0 0.0
  %883 = vmatprep.subr.mxu0 0.0
  %884 = vmatpush1.msra.mxu0 0.0
  %885 = vmatprep.subr.mxu0 0.0
  %886 = vmatpush1.msra.mxu0 0.0
  %887 = vmatprep.subr.mxu0 0.0
  %888 = vmatpush1.msra.mxu0 0.0
  %889 = vmatprep.subr.mxu0 0.0
  %890 = vmatpush1.msra.mxu0 0.0
  %891 = vmatprep.subr.mxu0 0.0
  %892 = vmatpush1.msra.mxu0 0.0
  %893 = vmatprep.subr.mxu0 0.0
  %894 = vmatpush1.msra.mxu0 0.0
  %895 = vmatprep.subr.mxu0 0.0
  %896 = vmatpush1.msra.mxu0 0.0
  %897 = vmatprep.subr.mxu0 0.0
  %898 = vmatpush1.msra.mxu0 0.0
  %899 = vmatprep.subr.mxu0 0.0
  %900 = vmatpush1.msra.mxu0 0.0
  %901 = vmatprep.subr.mxu0 0.0
  %902 = vmatpush1.msra.mxu0 0.0
  %903 = vmatprep.subr.mxu0 0.0
  %904 = vmatpush1.msra.mxu0 0.0
  %905 = vmatprep.subr.mxu0 0.0
  %906 = vmatpush1.msra.mxu0 0.0
  %907 = vmatprep.subr.mxu0 0.0
  %908 = vmatpush1.msra.mxu0 0.0
  %909 = vmatprep.subr.mxu0 0.0
  %910 = vmatpush1.msra.mxu0 0.0
  %911 = vmatprep.subr.mxu0 0.0
  %912 = vmatpush1.msra.mxu0 0.0
  %913 = vmatprep.subr.mxu0 0.0
  %914 = vmatpush1.msra.mxu0 0.0
  %915 = vmatprep.mubr.f32.mxu0 0.0
  %916 = vmatmul.mubr.f32.gmra.mrb[0].mxu0 %v840
  %v917 = vpop.f32.mrb[0].mxu0
  %v918 = vadd.f32 0.0, %v917
  %v919 = vpop.f32.mrb[0].mxu0
  %920 = vmatprep.mubr.f32.mxu0 0.0
  %921 = vmatmul.mubr.f32.gmra.mrb[0].mxu0 %v843
  %v922 = vpop.f32.mrb[0].mxu0
  %v923 = vadd.f32 0.0, %v922
  %v924 = vpop.f32.mrb[0].mxu0
  %925 = vmatprep.mubr.f32.mxu0 0.0
  %926 = vmatmul.mubr.f32.gmra.mrb[0].mxu0 %v846
  %v927 = vpop.f32.mrb[0].mxu0
  %v928 = vadd.f32 0.0, %v927
  %v929 = vpop.f32.mrb[0].mxu0
  %930 = vmatprep.mubr.f32.mxu0 0.0
  %931 = vmatmul.mubr.f32.gmra.mrb[0].mxu0 %v849
  %v932 = vpop.f32.mrb[0].mxu0
  %v933 = vadd.f32 0.0, %v932
  %v934 = vpop.f32.mrb[0].mxu0
  %935 = vdwg.mxu0
  %936 = vst.msk [vmem:[%s12] sm:$0xff] %vm518, %v918
  %937 = vst.msk [vmem:[%s12 + $0x8] sm:$0xff] %vm518, %v923
  %938 = vst.msk [vmem:[%s12 + $0x10] sm:$0xff] %vm518, %v928
  %939 = vst.msk [vmem:[%s12 + $0x18] sm:$0xff] %vm518, %v933
  // Predicated region
  $region50: #{tpu_custom_call.1} parent=0 // pred_check
    _
  $region51: #{tpu_custom_call.1} parent=0 // pred_check_branch
    %941 = sbr.rel (0) target = $region53
  $region52: #{tpu_custom_call.1} parent=0 // pred_region
    _
  $region53: #{tpu_custom_call.1} parent=0 // pred_fallthru
    _
  // Predicated region
  $region54: #{tpu_custom_call.1} parent=0 // pred_check
    _
  $region55: #{tpu_custom_call.1} parent=0 // pred_check_branch
    %943 = sbr.rel (0) target = $region57
  $region56: #{tpu_custom_call.1} parent=0 // pred_region
    _
  $region57: #{tpu_custom_call.1} parent=0 // pred_fallthru
    _

</llo_original>
